<compile_context>
chip_gen: v7x
topology: tpu7x:2x2x1
jax: 0.10.0
libtpu: 0.0.40
codegen_flags: <defaults>
</compile_context>

<pallas_src>
import numpy as np
import jax
import jax.numpy as jnp
from jax import lax
from jax.experimental import pallas as pl
from jax.experimental.pallas import tpu as pltpu

BN_EPS = 1e-5


# ----------------------------------------------------------------------------
# Pallas kernel: fused conv1+bn1+relu -> conv2+bn2+relu -> downsample+scatter
# ----------------------------------------------------------------------------
def _fused_block_kernel(tile_cnt_ref,   # SMEM (num_tiles,) int32: active blocks per tile
                        act_ref,        # (TB, 1)           f32  per-block active flag
                        x_ref,          # (TB, P*Cin)       compute dtype
                        w1d_ref,        # (P*Cin, 2*P*Cout) compute dtype [conv1 | downsample]
                        w2k_ref,        # (P*Cout, P*Cout)  compute dtype
                        sb_ref,         # (8, P*Cout)       f32 rows: s1,t1,s2,t2,bd,pad
                        o_ref):         # (TB, P*Cout)      compute dtype
    tb = o_ref.shape[0]
    pcout = o_ref.shape[1]
    cnt = tile_cnt_ref[pl.program_id(0)]

    def conv_path(x):
        # conv1 (1x1) + folded bn1 + ReLU.
        h = jnp.dot(x, w1d_ref[:, :pcout], preferred_element_type=jnp.float32)
        h = jnp.maximum(h * sb_ref[0:1, :] + sb_ref[1:2, :], 0.0)
        # conv2 (3x3, per-block zero padding) Kronecker-folded into a single
        # K = P*Cout matmul (lane-dense 128x128 for bs=4, Cout=8).
        y2 = jnp.dot(h.astype(w2k_ref.dtype), w2k_ref[...],
                     preferred_element_type=jnp.float32)
        return jnp.maximum(y2 * sb_ref[2:3, :] + sb_ref[3:4, :], 0.0)

    def ds_path(x):
        # ybase = downsample(x): 1x1 conv as kron(I_P, Wd) matmul + bias.
        return jnp.dot(x, w1d_ref[:, pcout:],
                       preferred_element_type=jnp.float32) + sb_ref[4:5, :]

    # Three-way per-tile specialisation (SBNet sparsity).
    @pl.when(cnt == 0)                       # fully inactive: downsample only
    def _():
        o_ref[...] = ds_path(x_ref[...]).astype(o_ref.dtype)

    @pl.when(cnt == tb)                      # fully active: conv only, no ds / select
    def _():
        o_ref[...] = conv_path(x_ref[...]).astype(o_ref.dtype)

    @pl.when(jnp.logical_and(cnt > 0, cnt < tb))   # mixed tile
    def _():
        x = x_ref[...]
        # conv1 + downsample fused into one N = 2*P*Cout (=256) matmul:
        # fills the 256-wide MXU on v6e/v7x and shares the x operand read.
        hd = jnp.dot(x, w1d_ref[...], preferred_element_type=jnp.float32)
        ybase = hd[:, pcout:] + sb_ref[4:5, :]
        h = jnp.maximum(hd[:, :pcout] * sb_ref[0:1, :] + sb_ref[1:2, :], 0.0)
        y2 = jnp.dot(h.astype(w2k_ref.dtype), w2k_ref[...],
                     preferred_element_type=jnp.float32)
        y2 = jnp.maximum(y2 * sb_ref[2:3, :] + sb_ref[3:4, :], 0.0)
        # Fused SparseScatter (add=False): overwrite active blocks only.
        o_ref[...] = jnp.where(act_ref[...] > 0.0, y2, ybase).astype(o_ref.dtype)


# ----------------------------------------------------------------------------
# Pallas wrapper
# ----------------------------------------------------------------------------
def _num_parallel_cores():
    """2 on v7x (megacore: 'parallel' grid axis sharded across TCs), else 1."""
    try:
        kind = jax.devices()[0].device_kind.lower()
    except Exception:
        return 1
    return 2 if ("v7" in kind or "7x" in kind) else 1


def _choose_tb(nb, n_cores):
    """Blocks (rows) per grid step.

    v5e/v6e have a single TensorCore: the grid is a serial loop, so take the
    biggest tile the cap allows (amortizes ~0.35us/step, fills the MXU M dim).
    v7x: keep an EVEN tile count so both TensorCores get equal work, with
    tiles as large as the cap allows.  Per-step VMEM at TB=1024 is well under
    1 MiB -> no vmem_limit override needed on any generation (incl. v7x's
    64 MiB VMEM)."""
    cap = 1024
    if nb <= 8:
        return nb
    if n_cores <= 1:
        return min(cap, nb)
    min_tiles = -(-nb // cap)                         # tiles needed at the cap
    n_tiles = max(2, min_tiles + (min_tiles % 2))     # even, >= 2
    tb = -(-nb // n_tiles)
    tb = -(-tb // 8) * 8                              # sublane multiple
    return min(tb, cap)


def fused_sparse_block_pallas(tile_cnt, act, xb, w1d, w2k, sbias, *, tb, out_dtype):
    nbp, p_cin = xb.shape
    p_cout = w2k.shape[1]
    num_tiles = nbp // tb
    # NOTE: the grid-invariant operands (w1d, w2k, sbias) could additionally be
    # marked pipeline_mode=pl.Buffered(1) to avoid double-buffering; left at the
    # default for lowering robustness (they total < 64 KiB).
    grid_spec = pltpu.PrefetchScalarGridSpec(
        num_scalar_prefetch=1,               # per-tile active-block counts
        grid=(num_tiles,),
        in_specs=[
            pl.BlockSpec((tb, 1), lambda i, tc: (i, 0)),
            pl.BlockSpec((tb, p_cin), lambda i, tc: (i, 0)),
            pl.BlockSpec((p_cin, 2 * p_cout), lambda i, tc: (0, 0)),
            pl.BlockSpec((p_cout, p_cout), lambda i, tc: (0, 0)),
            pl.BlockSpec((8, p_cout), lambda i, tc: (0, 0)),
        ],
        out_specs=pl.BlockSpec((tb, p_cout), lambda i, tc: (i, 0)),
    )
    return pl.pallas_call(
        _fused_block_kernel,
        out_shape=jax.ShapeDtypeStruct((nbp, p_cout), out_dtype),
        grid_spec=grid_spec,
        compiler_params=pltpu.CompilerParams(
            dimension_semantics=("parallel",)),
    )(tile_cnt, act, xb, w1d, w2k, sbias)


# ----------------------------------------------------------------------------
# Parameter setup / folding (host / XLA glue)
# ----------------------------------------------------------------------------
def _build_shift_mats(bs):
    """(9, P, P) 0/1 matrices: per-tap spatial shift + zero padding inside one
    block.  Tap t = ky*3 + kx matches conv2_w[:, :, ky, kx]."""
    P = bs * bs
    G = np.zeros((9, P, P), np.float32)
    taps = [(d, e) for d in (-1, 0, 1) for e in (-1, 0, 1)]
    for t, (d, e) in enumerate(taps):
        for i in range(bs):
            for j in range(bs):
                ii, jj = i + d, j + e
                if 0 <= ii < bs and 0 <= jj < bs:
                    G[t, i * bs + j, ii * bs + jj] = 1.0
    return jnp.asarray(G)


def _fold_bn(conv_b, gamma, beta, mean, var):
    s = gamma / jnp.sqrt(var + BN_EPS)
    t = (conv_b - mean) * s + beta
    return s.reshape(1, -1), t.reshape(1, -1)


def init_params(key, cin, cout):
    """Deterministic synthetic parameters in PyTorch-native layouts."""
    ks = jax.random.split(key, 20)
    p = {
        'conv1_w': jax.random.normal(ks[0], (cout, cin, 1, 1)) * 0.3,
        'conv1_b': jax.random.normal(ks[1], (cout,)) * 0.1,
        'conv2_w': jax.random.normal(ks[2], (cout, cout, 3, 3)) * 0.2,
        'conv2_b': jax.random.normal(ks[3], (cout,)) * 0.1,
        # conv3/bn3 exist in __init__ but their output is dead in forward().
        'conv3_w': jax.random.normal(ks[4], (cout, cout, 1, 1)) * 0.3,
        'conv3_b': jax.random.normal(ks[5], (cout,)) * 0.1,
        'ds_w': jax.random.normal(ks[6], (cout, cin, 1, 1)) * 0.3,
        'ds_b': jax.random.normal(ks[7], (cout,)) * 0.1,
    }
    for i, name in enumerate(('bn1', 'bn2', 'bn3')):
        p[f'{name}_gamma'] = 0.5 + jax.random.uniform(ks[8 + i], (cout,))
        p[f'{name}_beta'] = jax.random.normal(ks[11 + i], (cout,)) * 0.1
        p[f'{name}_mean'] = jax.random.normal(ks[14 + i], (cout,)) * 0.1
        p[f'{name}_var'] = 0.5 + jax.random.uniform(ks[17 + i], (cout,))
    return jax.tree_util.tree_map(lambda a: a.astype(jnp.float32), p)


def sparse_block_forward(x_nchw, mask, raw, block_size=4, reduce_thresh=0.0,
                         avg_pool=False, compute_dtype=jnp.bfloat16):
    N, Cin, H, W = x_nchw.shape
    Cout = raw['conv1_w'].shape[0]
    bs = block_size
    nbh, nbw = H // bs, W // bs
    P = bs * bs
    NB = N * nbh * nbw
    PCin, PCout = P * Cin, P * Cout

    # --- ReduceMask: block pooling + threshold -------------------------------
    m = mask[:, 0].reshape(N, nbh, bs, nbw, bs)
    pooled = jnp.mean(m, axis=(2, 4)) if avg_pool else jnp.max(m, axis=(2, 4))
    active = (pooled > reduce_thresh).reshape(NB)

    # --- SparseGather: blockify NCHW -> (NB, P*Cin); bf16 cast is folded into
    # the transpose so the blocked intermediate is written at compute width.
    # TODO(synk): the NCHW <-> lane-dense blocked conversions on both sides are
    # still XLA-level passes (forced by the PyTorch NCHW interface); a blocked
    # / NHWC module-facing layout would remove both extra HBM round trips.
    xb = (x_nchw.astype(compute_dtype)
                .reshape(N, Cin, nbh, bs, nbw, bs)
                .transpose(0, 2, 4, 3, 5, 1)
                .reshape(NB, PCin))

    # --- fold parameters into lane-dense kron / tiled form -------------------
    w1 = raw['conv1_w'][:, :, 0, 0].T                        # (Cin, Cout)
    s1, t1 = _fold_bn(raw['conv1_b'], raw['bn1_gamma'], raw['bn1_beta'],
                      raw['bn1_mean'], raw['bn1_var'])
    w2_taps = jnp.stack([raw['conv2_w'][:, :, ky, kx].T      # (9, Cout, Cout)
                         for ky in range(3) for kx in range(3)], axis=0)
    s2, t2 = _fold_bn(raw['conv2_b'], raw['bn2_gamma'], raw['bn2_beta'],
                      raw['bn2_mean'], raw['bn2_var'])
    wd = raw['ds_w'][:, :, 0, 0].T
    bd = raw['ds_b'].reshape(1, -1)

    eye_p = jnp.eye(P, dtype=jnp.float32)
    # 1x1 convs as kron(I_P, W): (P*Cin, P*Cout); conv1 and downsample are
    # concatenated along N so one matmul serves both in the mixed path.
    w1k = jnp.einsum('pq,io->piqo', eye_p, w1).reshape(PCin, PCout)
    wdk = jnp.einsum('pq,io->piqo', eye_p, wd).reshape(PCin, PCout)
    w1d = jnp.concatenate([w1k, wdk], axis=1)                # (PCin, 2*PCout)
    # 3x3 conv as sum_t kron(G_t^T, W2_t): (P*Cout, P*Cout)
    G = _build_shift_mats(bs)
    w2k = jnp.einsum('tpq,tio->qipo', G, w2_taps).reshape(PCout, PCout)
    # all per-channel scale/bias rows packed into one (8, P*Cout) f32 operand
    sbias = jnp.concatenate(
        [jnp.tile(s1, (1, P)), jnp.tile(t1, (1, P)),
         jnp.tile(s2, (1, P)), jnp.tile(t2, (1, P)),
         jnp.tile(bd, (1, P)), jnp.zeros((3, PCout), jnp.float32)], axis=0)

    # --- tiling / padding -----------------------------------------------------
    tb = _choose_tb(NB, _num_parallel_cores())
    nb_pad = -(-NB // tb) * tb
    if nb_pad != NB:
        xb = jnp.pad(xb, ((0, nb_pad - NB), (0, 0)))
        active = jnp.pad(active, (0, nb_pad - NB))
    act_f = active.astype(jnp.float32).reshape(nb_pad, 1)
    tile_cnt = jnp.sum(active.reshape(nb_pad // tb, tb).astype(jnp.int32), axis=1)

    # --- fused conv + downsample + scatter (single Pallas call) --------------
    out = fused_sparse_block_pallas(
        tile_cnt, act_f, xb,
        w1d.astype(compute_dtype), w2k.astype(compute_dtype), sbias,
        tb=tb, out_dtype=compute_dtype)

    # --- un-blockify (NB, P*Cout) -> NCHW (reads the half-width kernel output)
    y = (out[:NB].reshape(N, nbh, nbw, bs, bs, Cout)
                 .transpose(0, 5, 1, 3, 2, 4)
                 .reshape(N, Cout, H, W))
    return y


# ----------------------------------------------------------------------------
# Pure-JAX reference (for a correctness check of the Pallas path)
# ----------------------------------------------------------------------------
def reference_forward(x_nchw, mask, raw, bs, reduce_thresh=0.0):
    N, Cin, H, W = x_nchw.shape
    Cout = raw['conv1_w'].shape[0]
    nbh, nbw = H // bs, W // bs
    x = jnp.transpose(x_nchw, (0, 2, 3, 1))
    m = mask[:, 0].reshape(N, nbh, bs, nbw, bs)
    active = (jnp.max(m, axis=(2, 4)) > reduce_thresh).reshape(-1)

    xb = (x.reshape(N, nbh, bs, nbw, bs, Cin)
            .transpose(0, 1, 3, 2, 4, 5).reshape(-1, bs, bs, Cin))

    h = jnp.einsum('nhwc,oc->nhwo', xb, raw['conv1_w'][:, :, 0, 0]) + raw['conv1_b']
    h = ((h - raw['bn1_mean']) / jnp.sqrt(raw['bn1_var'] + BN_EPS)
         * raw['bn1_gamma'] + raw['bn1_beta'])
    h = jnp.maximum(h, 0.0)

    w2 = jnp.transpose(raw['conv2_w'], (2, 3, 1, 0))        # HWIO
    h2 = lax.conv_general_dilated(h, w2, (1, 1), 'SAME',
                                  dimension_numbers=('NHWC', 'HWIO', 'NHWC'))
    h2 = h2 + raw['conv2_b']
    h2 = ((h2 - raw['bn2_mean']) / jnp.sqrt(raw['bn2_var'] + BN_EPS)
          * raw['bn2_gamma'] + raw['bn2_beta'])
    h2 = jnp.maximum(h2, 0.0)

    ybase = jnp.einsum('nhwc,oc->nhwo', x, raw['ds_w'][:, :, 0, 0]) + raw['ds_b']
    ybb = (ybase.reshape(N, nbh, bs, nbw, bs, Cout)
                .transpose(0, 1, 3, 2, 4, 5).reshape(-1, bs, bs, Cout))
    out_b = jnp.where(active[:, None, None, None], h2, ybb)
    y = (out_b.reshape(N, nbh, nbw, bs, bs, Cout)
              .transpose(0, 1, 3, 2, 4, 5).reshape(N, H, W, Cout))
    return jnp.transpose(y, (0, 3, 1, 2))


# ----------------------------------------------------------------------------
if __name__ == "__main__":
    key = jax.random.PRNGKey(0)
    kx, km, kp = jax.random.split(key, 3)

    N, Cin, Cout, H, W, bs = 2, 4, 8, 16, 16, 4
    x = jax.random.normal(kx, (N, Cin, H, W), jnp.float32)
    mask = (jax.random.uniform(km, (N, 1, H, W)) > 0.9).astype(jnp.float32)
    raw = init_params(kp, Cin, Cout)

    fwd_bf16 = jax.jit(lambda a, b: sparse_block_forward(a, b, raw, block_size=bs))
    fwd_f32 = jax.jit(lambda a, b: sparse_block_forward(
        a, b, raw, block_size=bs, compute_dtype=jnp.float32))

    # Exact-semantics checks (f32 compute + f32 output) exercising all three
    # per-tile specialisations: mixed, fully active, fully inactive.
    for m_test in (mask, jnp.ones_like(mask), jnp.zeros_like(mask)):
        y_ref = reference_forward(x, m_test, raw, bs)
        y32 = jax.block_until_ready(fwd_f32(x, m_test))
        err32 = float(jnp.max(jnp.abs(y32 - y_ref)))
        assert jnp.allclose(y32, y_ref, atol=5e-4, rtol=5e-4), f"f32 max err={err32}"

    # Default bf16 MXU path (perf config, bf16 output); loose tolerance for
    # bf16 compute + bf16 storage rounding.
    y_ref = reference_forward(x, mask, raw, bs)
    y = jax.block_until_ready(fwd_bf16(x, mask))
    yf = y.astype(jnp.float32)
    err = float(jnp.max(jnp.abs(yf - y_ref)))
    assert jnp.allclose(yf, y_ref, atol=2e-1, rtol=1e-1), f"bf16 max err={err}"

    print("KERNEL_OK")
</pallas_src>

<mosaic_0001>
module attributes {stable_mosaic.version = 11 : i64} {
  func.func @_fused_block_kernel(%arg0: i32, %arg1: memref<1xi32, #tpu.memory_space<smem>>, %arg2: memref<32x1xf32, #tpu.memory_space<vmem>>, %arg3: memref<32x64xf32, #tpu.memory_space<vmem>>, %arg4: memref<64x256xf32, #tpu.memory_space<vmem>>, %arg5: memref<128x128xf32, #tpu.memory_space<vmem>>, %arg6: memref<8x128xf32, #tpu.memory_space<vmem>>, %arg7: memref<32x128xf32, #tpu.memory_space<vmem>>) attributes {dimension_semantics = [#tpu.dimension_semantics<parallel>], iteration_bounds = array<i64: 1>, scalar_prefetch = 1 : i64, scratch_operands = 0 : i64, tpu.core_type = #tpu.core_type<tc>, window_params = [{transform_indices = @transform_0, window_bounds = array<i64: 32, 1>}, {transform_indices = @transform_1, window_bounds = array<i64: 32, 64>}, {pipeline_mode = #tpu.pipeline_mode<synchronous>, transform_indices = @transform_2, window_bounds = array<i64: 64, 256>}, {pipeline_mode = #tpu.pipeline_mode<synchronous>, transform_indices = @transform_3, window_bounds = array<i64: 128, 128>}, {pipeline_mode = #tpu.pipeline_mode<synchronous>, transform_indices = @transform_4, window_bounds = array<i64: 8, 128>}, {transform_indices = @transform_5, window_bounds = array<i64: 32, 128>}]} {
    %0 = arith.index_cast %arg0 : i32 to index
    %1 = memref.load %arg1[%0] : memref<1xi32, #tpu.memory_space<smem>>
    %c0_i32 = arith.constant 0 : i32
    %2 = arith.cmpi eq, %1, %c0_i32 : i32
    %3 = arith.extui %2 : i1 to i32
    %c0_i32_0 = arith.constant 0 : i32
    %4 = arith.cmpi ne, %3, %c0_i32_0 : i32
    scf.if %4 {
      %c0 = arith.constant 0 : index
      %c0_5 = arith.constant 0 : index
      %13 = vector.load %arg3[%c0, %c0_5] : memref<32x64xf32, #tpu.memory_space<vmem>>, vector<32x64xf32>
      %c0_6 = arith.constant 0 : index
      %c128 = arith.constant 128 : index
      %14 = vector.load %arg4[%c0_6, %c128] : memref<64x256xf32, #tpu.memory_space<vmem>>, vector<64x128xf32>
      %cst = arith.constant dense<0.000000e+00> : vector<32x128xf32>
      %15 = tpu.matmul %13, %14, %cst {dimension_numbers = #tpu.dot_dimension_numbers<[1], [0], [0], [1], [0, 0, 1, 1], [], []>} : vector<32x64xf32>, vector<64x128xf32>, vector<32x128xf32> -> vector<32x128xf32>
      %c4 = arith.constant 4 : index
      %c0_7 = arith.constant 0 : index
      %16 = vector.load %arg6[%c4, %c0_7] : memref<8x128xf32, #tpu.memory_space<vmem>>, vector<1x128xf32>
      %17 = vector.broadcast %16 : vector<1x128xf32> to vector<32x128xf32>
      %18 = arith.addf %15, %17 : vector<32x128xf32>
      %c0_8 = arith.constant 0 : index
      %c0_9 = arith.constant 0 : index
      %19 = vector.load %arg7[%c0_8, %c0_9] : memref<32x128xf32, #tpu.memory_space<vmem>>, vector<32x128xf32>
      tpu.vector_store %arg7[%c0_8, %c0_9], %18 {strides = array<i32>} : memref<32x128xf32, #tpu.memory_space<vmem>>, vector<32x128xf32>,
    } else {
    }
    %c32_i32 = arith.constant 32 : i32
    %5 = arith.cmpi eq, %1, %c32_i32 : i32
    %6 = arith.extui %5 : i1 to i32
    %c0_i32_1 = arith.constant 0 : i32
    %7 = arith.cmpi ne, %6, %c0_i32_1 : i32
    scf.if %7 {
      %c0 = arith.constant 0 : index
      %c0_5 = arith.constant 0 : index
      %13 = vector.load %arg3[%c0, %c0_5] : memref<32x64xf32, #tpu.memory_space<vmem>>, vector<32x64xf32>
      %c0_6 = arith.constant 0 : index
      %c0_7 = arith.constant 0 : index
      %14 = vector.load %arg4[%c0_6, %c0_7] : memref<64x256xf32, #tpu.memory_space<vmem>>, vector<64x128xf32>
      %cst = arith.constant dense<0.000000e+00> : vector<32x128xf32>
      %15 = tpu.matmul %13, %14, %cst {dimension_numbers = #tpu.dot_dimension_numbers<[1], [0], [0], [1], [0, 0, 1, 1], [], []>} : vector<32x64xf32>, vector<64x128xf32>, vector<32x128xf32> -> vector<32x128xf32>
      %c0_8 = arith.constant 0 : index
      %c0_9 = arith.constant 0 : index
      %16 = vector.load %arg6[%c0_8, %c0_9] : memref<8x128xf32, #tpu.memory_space<vmem>>, vector<1x128xf32>
      %17 = vector.broadcast %16 : vector<1x128xf32> to vector<32x128xf32>
      %18 = arith.mulf %15, %17 : vector<32x128xf32>
      %c1 = arith.constant 1 : index
      %c0_10 = arith.constant 0 : index
      %19 = vector.load %arg6[%c1, %c0_10] : memref<8x128xf32, #tpu.memory_space<vmem>>, vector<1x128xf32>
      %20 = vector.broadcast %19 : vector<1x128xf32> to vector<32x128xf32>
      %21 = arith.addf %18, %20 : vector<32x128xf32>
      %cst_11 = arith.constant 0.000000e+00 : f32
      %22 = vector.broadcast %cst_11 : f32 to vector<32x128xf32>
      %23 = arith.maximumf %21, %22 : vector<32x128xf32>
      %c0_12 = arith.constant 0 : index
      %c0_13 = arith.constant 0 : index
      %24 = vector.load %arg5[%c0_12, %c0_13] : memref<128x128xf32, #tpu.memory_space<vmem>>, vector<128x128xf32>
      %cst_14 = arith.constant dense<0.000000e+00> : vector<32x128xf32>
      %25 = tpu.matmul %23, %24, %cst_14 {dimension_numbers = #tpu.dot_dimension_numbers<[1], [0], [0], [1], [0, 0, 1, 1], [], []>} : vector<32x128xf32>, vector<128x128xf32>, vector<32x128xf32> -> vector<32x128xf32>
      %c2 = arith.constant 2 : index
      %c0_15 = arith.constant 0 : index
      %26 = vector.load %arg6[%c2, %c0_15] : memref<8x128xf32, #tpu.memory_space<vmem>>, vector<1x128xf32>
      %27 = vector.broadcast %26 : vector<1x128xf32> to vector<32x128xf32>
      %28 = arith.mulf %25, %27 : vector<32x128xf32>
      %c3 = arith.constant 3 : index
      %c0_16 = arith.constant 0 : index
      %29 = vector.load %arg6[%c3, %c0_16] : memref<8x128xf32, #tpu.memory_space<vmem>>, vector<1x128xf32>
      %30 = vector.broadcast %29 : vector<1x128xf32> to vector<32x128xf32>
      %31 = arith.addf %28, %30 : vector<32x128xf32>
      %cst_17 = arith.constant 0.000000e+00 : f32
      %32 = vector.broadcast %cst_17 : f32 to vector<32x128xf32>
      %33 = arith.maximumf %31, %32 : vector<32x128xf32>
      %c0_18 = arith.constant 0 : index
      %c0_19 = arith.constant 0 : index
      %34 = vector.load %arg7[%c0_18, %c0_19] : memref<32x128xf32, #tpu.memory_space<vmem>>, vector<32x128xf32>
      tpu.vector_store %arg7[%c0_18, %c0_19], %33 {strides = array<i32>} : memref<32x128xf32, #tpu.memory_space<vmem>>, vector<32x128xf32>,
    } else {
    }
    %c0_i32_2 = arith.constant 0 : i32
    %8 = arith.cmpi sgt, %1, %c0_i32_2 : i32
    %c32_i32_3 = arith.constant 32 : i32
    %9 = arith.cmpi slt, %1, %c32_i32_3 : i32
    %10 = arith.andi %8, %9 : i1
    %11 = arith.extui %10 : i1 to i32
    %c0_i32_4 = arith.constant 0 : i32
    %12 = arith.cmpi ne, %11, %c0_i32_4 : i32
    scf.if %12 {
      %c0 = arith.constant 0 : index
      %c0_5 = arith.constant 0 : index
      %13 = vector.load %arg3[%c0, %c0_5] : memref<32x64xf32, #tpu.memory_space<vmem>>, vector<32x64xf32>
      %c0_6 = arith.constant 0 : index
      %c0_7 = arith.constant 0 : index
      %14 = vector.load %arg4[%c0_6, %c0_7] : memref<64x256xf32, #tpu.memory_space<vmem>>, vector<64x256xf32>
      %cst = arith.constant dense<0.000000e+00> : vector<32x256xf32>
      %15 = tpu.matmul %13, %14, %cst {dimension_numbers = #tpu.dot_dimension_numbers<[1], [0], [0], [1], [0, 0, 1, 1], [], []>} : vector<32x64xf32>, vector<64x256xf32>, vector<32x256xf32> -> vector<32x256xf32>
      %16 = vector.extract_strided_slice %15 {offsets = [0, 128], sizes = [32, 128], strides = [1, 1]} : vector<32x256xf32> to vector<32x128xf32>
      %c4 = arith.constant 4 : index
      %c0_8 = arith.constant 0 : index
      %17 = vector.load %arg6[%c4, %c0_8] : memref<8x128xf32, #tpu.memory_space<vmem>>, vector<1x128xf32>
      %18 = vector.broadcast %17 : vector<1x128xf32> to vector<32x128xf32>
      %19 = arith.addf %16, %18 : vector<32x128xf32>
      %20 = vector.extract_strided_slice %15 {offsets = [0, 0], sizes = [32, 128], strides = [1, 1]} : vector<32x256xf32> to vector<32x128xf32>
      %c0_9 = arith.constant 0 : index
      %c0_10 = arith.constant 0 : index
      %21 = vector.load %arg6[%c0_9, %c0_10] : memref<8x128xf32, #tpu.memory_space<vmem>>, vector<1x128xf32>
      %22 = vector.broadcast %21 : vector<1x128xf32> to vector<32x128xf32>
      %23 = arith.mulf %20, %22 : vector<32x128xf32>
      %c1 = arith.constant 1 : index
      %c0_11 = arith.constant 0 : index
      %24 = vector.load %arg6[%c1, %c0_11] : memref<8x128xf32, #tpu.memory_space<vmem>>, vector<1x128xf32>
      %25 = vector.broadcast %24 : vector<1x128xf32> to vector<32x128xf32>
      %26 = arith.addf %23, %25 : vector<32x128xf32>
      %cst_12 = arith.constant 0.000000e+00 : f32
      %27 = vector.broadcast %cst_12 : f32 to vector<32x128xf32>
      %28 = arith.maximumf %26, %27 : vector<32x128xf32>
      %c0_13 = arith.constant 0 : index
      %c0_14 = arith.constant 0 : index
      %29 = vector.load %arg5[%c0_13, %c0_14] : memref<128x128xf32, #tpu.memory_space<vmem>>, vector<128x128xf32>
      %cst_15 = arith.constant dense<0.000000e+00> : vector<32x128xf32>
      %30 = tpu.matmul %28, %29, %cst_15 {dimension_numbers = #tpu.dot_dimension_numbers<[1], [0], [0], [1], [0, 0, 1, 1], [], []>} : vector<32x128xf32>, vector<128x128xf32>, vector<32x128xf32> -> vector<32x128xf32>
      %c2 = arith.constant 2 : index
      %c0_16 = arith.constant 0 : index
      %31 = vector.load %arg6[%c2, %c0_16] : memref<8x128xf32, #tpu.memory_space<vmem>>, vector<1x128xf32>
      %32 = vector.broadcast %31 : vector<1x128xf32> to vector<32x128xf32>
      %33 = arith.mulf %30, %32 : vector<32x128xf32>
      %c3 = arith.constant 3 : index
      %c0_17 = arith.constant 0 : index
      %34 = vector.load %arg6[%c3, %c0_17] : memref<8x128xf32, #tpu.memory_space<vmem>>, vector<1x128xf32>
      %35 = vector.broadcast %34 : vector<1x128xf32> to vector<32x128xf32>
      %36 = arith.addf %33, %35 : vector<32x128xf32>
      %cst_18 = arith.constant 0.000000e+00 : f32
      %37 = vector.broadcast %cst_18 : f32 to vector<32x128xf32>
      %38 = arith.maximumf %36, %37 : vector<32x128xf32>
      %c0_19 = arith.constant 0 : index
      %c0_20 = arith.constant 0 : index
      %39 = vector.load %arg2[%c0_19, %c0_20] : memref<32x1xf32, #tpu.memory_space<vmem>>, vector<32x1xf32>
      %cst_21 = arith.constant 0.000000e+00 : f32
      %40 = vector.broadcast %cst_21 : f32 to vector<32x1xf32>
      %41 = arith.cmpf ogt, %39, %40 : vector<32x1xf32>
      %42 = vector.shape_cast %41 : vector<32x1xi1> to vector<32x1xi1>
      %43 = vector.broadcast %42 : vector<32x1xi1> to vector<32x128xi1>
      %44 = arith.select %43, %38, %19 : vector<32x128xi1>, vector<32x128xf32>
      %c0_22 = arith.constant 0 : index
      %c0_23 = arith.constant 0 : index
      %45 = vector.load %arg7[%c0_22, %c0_23] : memref<32x128xf32, #tpu.memory_space<vmem>>, vector<32x128xf32>
      tpu.vector_store %arg7[%c0_22, %c0_23], %44 {strides = array<i32>} : memref<32x128xf32, #tpu.memory_space<vmem>>, vector<32x128xf32>,
    } else {
    }
    return
  }
  func.func @transform_0(%arg0: i32, %arg1: memref<1xi32, #tpu.memory_space<smem>>) -> (i32, i32) {
    %c0_i32 = arith.constant 0 : i32
    %c0_i32_0 = arith.constant 0 : i32
    return %arg0, %c0_i32 : i32, i32
  }
  func.func @transform_1(%arg0: i32, %arg1: memref<1xi32, #tpu.memory_space<smem>>) -> (i32, i32) {
    %c0_i32 = arith.constant 0 : i32
    %c0_i32_0 = arith.constant 0 : i32
    return %arg0, %c0_i32 : i32, i32
  }
  func.func @transform_2(%arg0: i32, %arg1: memref<1xi32, #tpu.memory_space<smem>>) -> (i32, i32) {
    %c0_i32 = arith.constant 0 : i32
    %c0_i32_0 = arith.constant 0 : i32
    %c0_i32_1 = arith.constant 0 : i32
    return %c0_i32, %c0_i32_0 : i32, i32
  }
  func.func @transform_3(%arg0: i32, %arg1: memref<1xi32, #tpu.memory_space<smem>>) -> (i32, i32) {
    %c0_i32 = arith.constant 0 : i32
    %c0_i32_0 = arith.constant 0 : i32
    %c0_i32_1 = arith.constant 0 : i32
    return %c0_i32, %c0_i32_0 : i32, i32
  }
  func.func @transform_4(%arg0: i32, %arg1: memref<1xi32, #tpu.memory_space<smem>>) -> (i32, i32) {
    %c0_i32 = arith.constant 0 : i32
    %c0_i32_0 = arith.constant 0 : i32
    %c0_i32_1 = arith.constant 0 : i32
    return %c0_i32, %c0_i32_0 : i32, i32
  }
  func.func @transform_5(%arg0: i32, %arg1: memref<1xi32, #tpu.memory_space<smem>>) -> (i32, i32) {
    %c0_i32 = arith.constant 0 : i32
    %c0_i32_0 = arith.constant 0 : i32
    return %arg0, %c0_i32 : i32, i32
  }
}

</mosaic_0001>

<llo_original>
// kernel: squeeze.1
$region0: #{squeeze.1}
  %s0 = inlined_call_operand.vmem [shape: f32[2,1,16,16], index: 0, kind: input, shape index: {}]
  %s1 = inlined_call_operand.vmem [shape: f32[2,4,4,4,4], index: 1, kind: output, shape index: {}]
  $region1: #{squeeze.1} parent=0
    #allocation0 [shape = 'u8[131072]{0}', space=vmem, size = 0x20000, scoped, tag = 'scoped mem for output reshape']
    %v2 = vld [vmem:[%s0] sm:$0xff]
    %vm3 = vcmask 31744
    %4 = vst.msk [vmem:[#allocation0] ss:$8 sm:$0xf] %vm3, %v2
    %5 = vst.msk [vmem:[#allocation0] ss:$8 sm:$0xf0] %vm3, %v2
    %s6 = scalar_lea.vmem %s0, 8
    %v7 = vld [vmem:[%s6] sm:$0xff]
    %vm8 = vcmask 31744
    %s9 = scalar_lea.vmem [#allocation0], 64
    %10 = vst.msk [vmem:[%s9] ss:$8 sm:$0xf] %vm8, %v7
    %s11 = scalar_lea.vmem [#allocation0], 64
    %12 = vst.msk [vmem:[%s11] ss:$8 sm:$0xf0] %vm8, %v7
    %s13 = scalar_lea.vmem %s0, 16
    %v14 = vld [vmem:[%s13] sm:$0xff]
    %vm15 = vcmask 31744
    %s16 = scalar_lea.vmem [#allocation0], 128
    %17 = vst.msk [vmem:[%s16] ss:$8 sm:$0xf] %vm15, %v14
    %s18 = scalar_lea.vmem [#allocation0], 128
    %19 = vst.msk [vmem:[%s18] ss:$8 sm:$0xf0] %vm15, %v14
    %s20 = scalar_lea.vmem %s0, 24
    %v21 = vld [vmem:[%s20] sm:$0xff]
    %vm22 = vcmask 31744
    %s23 = scalar_lea.vmem [#allocation0], 192
    %24 = vst.msk [vmem:[%s23] ss:$8 sm:$0xf] %vm22, %v21
    %s25 = scalar_lea.vmem [#allocation0], 192
    %26 = vst.msk [vmem:[%s25] ss:$8 sm:$0xf0] %vm22, %v21
    %v27 = vld [vmem:[%s0] sm:$0xff]
    %28 = vrot.lane.b32.xlu0 %v27, 124
    %v29 = vpop.permute.xlu0 %28
    %vm30 = vcmask 31744
    %s31 = scalar_lea.vmem [#allocation0], 1
    %32 = vst.msk [vmem:[%s31] ss:$8 sm:$0xf] %vm30, %v29
    %s33 = scalar_lea.vmem [#allocation0], 1
    %34 = vst.msk [vmem:[%s33] ss:$8 sm:$0xf0] %vm30, %v29
    %s35 = scalar_lea.vmem %s0, 8
    %v36 = vld [vmem:[%s35] sm:$0xff]
    %37 = vrot.lane.b32.xlu0 %v36, 124
    %v38 = vpop.permute.xlu0 %37
    %vm39 = vcmask 31744
    %s40 = scalar_lea.vmem [#allocation0], 65
    %41 = vst.msk [vmem:[%s40] ss:$8 sm:$0xf] %vm39, %v38
    %s42 = scalar_lea.vmem [#allocation0], 65
    %43 = vst.msk [vmem:[%s42] ss:$8 sm:$0xf0] %vm39, %v38
    %s44 = scalar_lea.vmem %s0, 16
    %v45 = vld [vmem:[%s44] sm:$0xff]
    %46 = vrot.lane.b32.xlu0 %v45, 124
    %v47 = vpop.permute.xlu0 %46
    %vm48 = vcmask 31744
    %s49 = scalar_lea.vmem [#allocation0], 129
    %50 = vst.msk [vmem:[%s49] ss:$8 sm:$0xf] %vm48, %v47
    %s51 = scalar_lea.vmem [#allocation0], 129
    %52 = vst.msk [vmem:[%s51] ss:$8 sm:$0xf0] %vm48, %v47
    %s53 = scalar_lea.vmem %s0, 24
    %v54 = vld [vmem:[%s53] sm:$0xff]
    %55 = vrot.lane.b32.xlu0 %v54, 124
    %v56 = vpop.permute.xlu0 %55
    %vm57 = vcmask 31744
    %s58 = scalar_lea.vmem [#allocation0], 193
    %59 = vst.msk [vmem:[%s58] ss:$8 sm:$0xf] %vm57, %v56
    %s60 = scalar_lea.vmem [#allocation0], 193
    %61 = vst.msk [vmem:[%s60] ss:$8 sm:$0xf0] %vm57, %v56
    %v62 = vld [vmem:[%s0] sm:$0xff]
    %63 = vrot.lane.b32.xlu0 %v62, 120
    %v64 = vpop.permute.xlu0 %63
    %vm65 = vcmask 31744
    %s66 = scalar_lea.vmem [#allocation0], 2
    %67 = vst.msk [vmem:[%s66] ss:$8 sm:$0xf] %vm65, %v64
    %s68 = scalar_lea.vmem [#allocation0], 2
    %69 = vst.msk [vmem:[%s68] ss:$8 sm:$0xf0] %vm65, %v64
    %s70 = scalar_lea.vmem %s0, 8
    %v71 = vld [vmem:[%s70] sm:$0xff]
    %72 = vrot.lane.b32.xlu0 %v71, 120
    %v73 = vpop.permute.xlu0 %72
    %vm74 = vcmask 31744
    %s75 = scalar_lea.vmem [#allocation0], 66
    %76 = vst.msk [vmem:[%s75] ss:$8 sm:$0xf] %vm74, %v73
    %s77 = scalar_lea.vmem [#allocation0], 66
    %78 = vst.msk [vmem:[%s77] ss:$8 sm:$0xf0] %vm74, %v73
    %s79 = scalar_lea.vmem %s0, 16
    %v80 = vld [vmem:[%s79] sm:$0xff]
    %81 = vrot.lane.b32.xlu0 %v80, 120
    %v82 = vpop.permute.xlu0 %81
    %vm83 = vcmask 31744
    %s84 = scalar_lea.vmem [#allocation0], 130
    %85 = vst.msk [vmem:[%s84] ss:$8 sm:$0xf] %vm83, %v82
    %s86 = scalar_lea.vmem [#allocation0], 130
    %87 = vst.msk [vmem:[%s86] ss:$8 sm:$0xf0] %vm83, %v82
    %s88 = scalar_lea.vmem %s0, 24
    %v89 = vld [vmem:[%s88] sm:$0xff]
    %90 = vrot.lane.b32.xlu0 %v89, 120
    %v91 = vpop.permute.xlu0 %90
    %vm92 = vcmask 31744
    %s93 = scalar_lea.vmem [#allocation0], 194
    %94 = vst.msk [vmem:[%s93] ss:$8 sm:$0xf] %vm92, %v91
    %s95 = scalar_lea.vmem [#allocation0], 194
    %96 = vst.msk [vmem:[%s95] ss:$8 sm:$0xf0] %vm92, %v91
    %v97 = vld [vmem:[%s0] sm:$0xff]
    %98 = vrot.lane.b32.xlu0 %v97, 116
    %v99 = vpop.permute.xlu0 %98
    %vm100 = vcmask 31744
    %s101 = scalar_lea.vmem [#allocation0], 3
    %102 = vst.msk [vmem:[%s101] ss:$8 sm:$0xf] %vm100, %v99
    %s103 = scalar_lea.vmem [#allocation0], 3
    %104 = vst.msk [vmem:[%s103] ss:$8 sm:$0xf0] %vm100, %v99
    %s105 = scalar_lea.vmem %s0, 8
    %v106 = vld [vmem:[%s105] sm:$0xff]
    %107 = vrot.lane.b32.xlu0 %v106, 116
    %v108 = vpop.permute.xlu0 %107
    %vm109 = vcmask 31744
    %s110 = scalar_lea.vmem [#allocation0], 67
    %111 = vst.msk [vmem:[%s110] ss:$8 sm:$0xf] %vm109, %v108
    %s112 = scalar_lea.vmem [#allocation0], 67
    %113 = vst.msk [vmem:[%s112] ss:$8 sm:$0xf0] %vm109, %v108
    %s114 = scalar_lea.vmem %s0, 16
    %v115 = vld [vmem:[%s114] sm:$0xff]
    %116 = vrot.lane.b32.xlu0 %v115, 116
    %v117 = vpop.permute.xlu0 %116
    %vm118 = vcmask 31744
    %s119 = scalar_lea.vmem [#allocation0], 131
    %120 = vst.msk [vmem:[%s119] ss:$8 sm:$0xf] %vm118, %v117
    %s121 = scalar_lea.vmem [#allocation0], 131
    %122 = vst.msk [vmem:[%s121] ss:$8 sm:$0xf0] %vm118, %v117
    %s123 = scalar_lea.vmem %s0, 24
    %v124 = vld [vmem:[%s123] sm:$0xff]
    %125 = vrot.lane.b32.xlu0 %v124, 116
    %v126 = vpop.permute.xlu0 %125
    %vm127 = vcmask 31744
    %s128 = scalar_lea.vmem [#allocation0], 195
    %129 = vst.msk [vmem:[%s128] ss:$8 sm:$0xf] %vm127, %v126
    %s130 = scalar_lea.vmem [#allocation0], 195
    %131 = vst.msk [vmem:[%s130] ss:$8 sm:$0xf0] %vm127, %v126
    %s133 = sshllo.u32 0, 4
    %v135 = vld [vmem:[#allocation0] sm:%s133]
    %s136 = sshllo.u32 0, 4
    %137 = vst [vmem:[%s1] sm:%s136] %v135
    %s138 = scalar_lea.vmem [#allocation0], 8
    %v139 = vld [vmem:[%s138] sm:%s133]
    %s140 = sshllo.u32 0, 4
    %s141 = scalar_lea.vmem %s1, 4
    %142 = vst [vmem:[%s141] sm:%s140] %v139
    %s143 = scalar_lea.vmem [#allocation0], 16
    %v144 = vld [vmem:[%s143] sm:%s133]
    %s145 = sshllo.u32 0, 4
    %s146 = smul.addr 4, 2
    %s147 = scalar_lea.vmem %s1, %s146
    %148 = vst [vmem:[%s147] sm:%s145] %v144
    %s149 = scalar_lea.vmem [#allocation0], 24
    %v150 = vld [vmem:[%s149] sm:%s133]
    %s151 = sshllo.u32 0, 4
    %s152 = smul.addr 4, 3
    %s153 = scalar_lea.vmem %s1, %s152
    %154 = vst [vmem:[%s153] sm:%s151] %v150
    %s155 = scalar_lea.vmem [#allocation0], 32
    %v156 = vld [vmem:[%s155] sm:%s133]
    %s157 = sshllo.u32 0, 4
    %s158 = smul.addr 4, 4
    %s159 = scalar_lea.vmem %s1, %s158
    %160 = vst [vmem:[%s159] sm:%s157] %v156
    %s161 = scalar_lea.vmem [#allocation0], 40
    %v162 = vld [vmem:[%s161] sm:%s133]
    %s163 = sshllo.u32 0, 4
    %s164 = smul.addr 4, 5
    %s165 = scalar_lea.vmem %s1, %s164
    %166 = vst [vmem:[%s165] sm:%s163] %v162
    %s167 = scalar_lea.vmem [#allocation0], 48
    %v168 = vld [vmem:[%s167] sm:%s133]
    %s169 = sshllo.u32 0, 4
    %s170 = smul.addr 4, 6
    %s171 = scalar_lea.vmem %s1, %s170
    %172 = vst [vmem:[%s171] sm:%s169] %v168
    %s173 = scalar_lea.vmem [#allocation0], 56
    %v174 = vld [vmem:[%s173] sm:%s133]
    %s175 = sshllo.u32 0, 4
    %s176 = smul.addr 4, 7
    %s177 = scalar_lea.vmem %s1, %s176
    %178 = vst [vmem:[%s177] sm:%s175] %v174
    %s179 = scalar_lea.vmem [#allocation0], 64
    %v180 = vld [vmem:[%s179] sm:%s133]
    %s181 = sshllo.u32 0, 4
    %s182 = smul.addr 4, 8
    %s183 = scalar_lea.vmem %s1, %s182
    %184 = vst [vmem:[%s183] sm:%s181] %v180
    %s185 = scalar_lea.vmem [#allocation0], 72
    %v186 = vld [vmem:[%s185] sm:%s133]
    %s187 = sshllo.u32 0, 4
    %s188 = smul.addr 4, 9
    %s189 = scalar_lea.vmem %s1, %s188
    %190 = vst [vmem:[%s189] sm:%s187] %v186
    %s191 = scalar_lea.vmem [#allocation0], 80
    %v192 = vld [vmem:[%s191] sm:%s133]
    %s193 = sshllo.u32 0, 4
    %s194 = smul.addr 4, 10
    %s195 = scalar_lea.vmem %s1, %s194
    %196 = vst [vmem:[%s195] sm:%s193] %v192
    %s197 = scalar_lea.vmem [#allocation0], 88
    %v198 = vld [vmem:[%s197] sm:%s133]
    %s199 = sshllo.u32 0, 4
    %s200 = smul.addr 4, 11
    %s201 = scalar_lea.vmem %s1, %s200
    %202 = vst [vmem:[%s201] sm:%s199] %v198
    %s203 = scalar_lea.vmem [#allocation0], 96
    %v204 = vld [vmem:[%s203] sm:%s133]
    %s205 = sshllo.u32 0, 4
    %s206 = smul.addr 4, 12
    %s207 = scalar_lea.vmem %s1, %s206
    %208 = vst [vmem:[%s207] sm:%s205] %v204
    %s209 = scalar_lea.vmem [#allocation0], 104
    %v210 = vld [vmem:[%s209] sm:%s133]
    %s211 = sshllo.u32 0, 4
    %s212 = smul.addr 4, 13
    %s213 = scalar_lea.vmem %s1, %s212
    %214 = vst [vmem:[%s213] sm:%s211] %v210
    %s215 = scalar_lea.vmem [#allocation0], 112
    %v216 = vld [vmem:[%s215] sm:%s133]
    %s217 = sshllo.u32 0, 4
    %s218 = smul.addr 4, 14
    %s219 = scalar_lea.vmem %s1, %s218
    %220 = vst [vmem:[%s219] sm:%s217] %v216
    %s221 = scalar_lea.vmem [#allocation0], 120
    %v222 = vld [vmem:[%s221] sm:%s133]
    %s223 = sshllo.u32 0, 4
    %s224 = smul.addr 4, 15
    %s225 = scalar_lea.vmem %s1, %s224
    %226 = vst [vmem:[%s225] sm:%s223] %v222
    %s227 = scalar_lea.vmem [#allocation0], 128
    %v228 = vld [vmem:[%s227] sm:%s133]
    %s229 = sshllo.u32 0, 4
    %s230 = smul.addr 4, 16
    %s231 = scalar_lea.vmem %s1, %s230
    %232 = vst [vmem:[%s231] sm:%s229] %v228
    %s233 = scalar_lea.vmem [#allocation0], 136
    %v234 = vld [vmem:[%s233] sm:%s133]
    %s235 = sshllo.u32 0, 4
    %s236 = smul.addr 4, 17
    %s237 = scalar_lea.vmem %s1, %s236
    %238 = vst [vmem:[%s237] sm:%s235] %v234
    %s239 = scalar_lea.vmem [#allocation0], 144
    %v240 = vld [vmem:[%s239] sm:%s133]
    %s241 = sshllo.u32 0, 4
    %s242 = smul.addr 4, 18
    %s243 = scalar_lea.vmem %s1, %s242
    %244 = vst [vmem:[%s243] sm:%s241] %v240
    %s245 = scalar_lea.vmem [#allocation0], 152
    %v246 = vld [vmem:[%s245] sm:%s133]
    %s247 = sshllo.u32 0, 4
    %s248 = smul.addr 4, 19
    %s249 = scalar_lea.vmem %s1, %s248
    %250 = vst [vmem:[%s249] sm:%s247] %v246
    %s251 = scalar_lea.vmem [#allocation0], 160
    %v252 = vld [vmem:[%s251] sm:%s133]
    %s253 = sshllo.u32 0, 4
    %s254 = smul.addr 4, 20
    %s255 = scalar_lea.vmem %s1, %s254
    %256 = vst [vmem:[%s255] sm:%s253] %v252
    %s257 = scalar_lea.vmem [#allocation0], 168
    %v258 = vld [vmem:[%s257] sm:%s133]
    %s259 = sshllo.u32 0, 4
    %s260 = smul.addr 4, 21
    %s261 = scalar_lea.vmem %s1, %s260
    %262 = vst [vmem:[%s261] sm:%s259] %v258
    %s263 = scalar_lea.vmem [#allocation0], 176
    %v264 = vld [vmem:[%s263] sm:%s133]
    %s265 = sshllo.u32 0, 4
    %s266 = smul.addr 4, 22
    %s267 = scalar_lea.vmem %s1, %s266
    %268 = vst [vmem:[%s267] sm:%s265] %v264
    %s269 = scalar_lea.vmem [#allocation0], 184
    %v270 = vld [vmem:[%s269] sm:%s133]
    %s271 = sshllo.u32 0, 4
    %s272 = smul.addr 4, 23
    %s273 = scalar_lea.vmem %s1, %s272
    %274 = vst [vmem:[%s273] sm:%s271] %v270
    %s275 = scalar_lea.vmem [#allocation0], 192
    %v276 = vld [vmem:[%s275] sm:%s133]
    %s277 = sshllo.u32 0, 4
    %s278 = smul.addr 4, 24
    %s279 = scalar_lea.vmem %s1, %s278
    %280 = vst [vmem:[%s279] sm:%s277] %v276
    %s281 = scalar_lea.vmem [#allocation0], 200
    %v282 = vld [vmem:[%s281] sm:%s133]
    %s283 = sshllo.u32 0, 4
    %s284 = smul.addr 4, 25
    %s285 = scalar_lea.vmem %s1, %s284
    %286 = vst [vmem:[%s285] sm:%s283] %v282
    %s287 = scalar_lea.vmem [#allocation0], 208
    %v288 = vld [vmem:[%s287] sm:%s133]
    %s289 = sshllo.u32 0, 4
    %s290 = smul.addr 4, 26
    %s291 = scalar_lea.vmem %s1, %s290
    %292 = vst [vmem:[%s291] sm:%s289] %v288
    %s293 = scalar_lea.vmem [#allocation0], 216
    %v294 = vld [vmem:[%s293] sm:%s133]
    %s295 = sshllo.u32 0, 4
    %s296 = smul.addr 4, 27
    %s297 = scalar_lea.vmem %s1, %s296
    %298 = vst [vmem:[%s297] sm:%s295] %v294
    %s299 = scalar_lea.vmem [#allocation0], 224
    %v300 = vld [vmem:[%s299] sm:%s133]
    %s301 = sshllo.u32 0, 4
    %s302 = smul.addr 4, 28
    %s303 = scalar_lea.vmem %s1, %s302
    %304 = vst [vmem:[%s303] sm:%s301] %v300
    %s305 = scalar_lea.vmem [#allocation0], 232
    %v306 = vld [vmem:[%s305] sm:%s133]
    %s307 = sshllo.u32 0, 4
    %s308 = smul.addr 4, 29
    %s309 = scalar_lea.vmem %s1, %s308
    %310 = vst [vmem:[%s309] sm:%s307] %v306
    %s311 = scalar_lea.vmem [#allocation0], 240
    %v312 = vld [vmem:[%s311] sm:%s133]
    %s313 = sshllo.u32 0, 4
    %s314 = smul.addr 4, 30
    %s315 = scalar_lea.vmem %s1, %s314
    %316 = vst [vmem:[%s315] sm:%s313] %v312
    %s317 = scalar_lea.vmem [#allocation0], 248
    %v318 = vld [vmem:[%s317] sm:%s133]
    %s319 = sshllo.u32 0, 4
    %s320 = smul.addr 4, 31
    %s321 = scalar_lea.vmem %s1, %s320
    %322 = vst [vmem:[%s321] sm:%s319] %v318

// kernel: _lambda_.1
$region0: #{_lambda_.1}
  #allocation0 [shape = 'u32[]', space=smem, size = 0x4, offset = 0x4, fixed_abs, tag = 'smem constant byte address 0x4 - core index']
  #allocation1 [shape = 'u32[144,128]{1,0:T(1,128)}', space=vmem, size = 0x12000, scoped, tag = 'internal scratch']
  #allocation2 [shape = 's32[1]{0}', space=sflag, size = 0x4, scoped, tag = 'scoped memory for _lambda_.1']
  #allocation3 [shape = 's32[1]{0:T(128)S(6)}', space=smem, size = 0x200, scoped, tag = 'prefetched SMEM operand 0']
  %s0 = inlined_call_operand.<no memory space> [shape: s32[1], index: 0, kind: input, shape index: {}]
  %s1 = inlined_call_operand.vmem [shape: f32[32,1], index: 1, kind: input, shape index: {}]
  %s2 = inlined_call_operand.vmem [shape: f32[32,64], index: 2, kind: input, shape index: {}]
  %s3 = inlined_call_operand.vmem [shape: f32[64,256], index: 3, kind: input, shape index: {}]
  %s4 = inlined_call_operand.vmem [shape: f32[128,128], index: 4, kind: input, shape index: {}]
  %s5 = inlined_call_operand.vmem [shape: f32[8,128], index: 5, kind: input, shape index: {}]
  %s6 = inlined_call_operand.vmem [shape: f32[32,128], index: 6, kind: output, shape index: {}]
  %s7 = sld [smem:[#allocation0]]
  $region42: #{_lambda_.1} parent=0
    _
  %s9 = ssub.s32 1, %s7
  %s10 = scalar_select 0, %s9, %s7
  %11 = sst [smem:[#allocation3]] %s0
  // Predicated region
  $region2: #{_lambda_.1} parent=0 // pred_check
    _
  $region3: #{_lambda_.1} parent=0 // pred_check_branch
    %13 = sbr.rel (0) target = $region5
  $region4: #{_lambda_.1} parent=0 // pred_region
    _
  $region5: #{_lambda_.1} parent=0 // pred_fallthru
    _
  // Predicated region
  $region6: #{_lambda_.1} parent=0 // pred_check
    _
  $region7: #{_lambda_.1} parent=0 // pred_check_branch
    %15 = sbr.rel (0) target = $region9
  $region8: #{_lambda_.1} parent=0 // pred_region
    _
  $region9: #{_lambda_.1} parent=0 // pred_fallthru
    _
  // Predicated region
  $region10: #{_lambda_.1} parent=0 // pred_check
    _
  $region11: #{_lambda_.1} parent=0 // pred_check_branch
    %17 = sbr.rel (0) target = $region13
  $region12: #{_lambda_.1} parent=0 // pred_region
    _
  $region13: #{_lambda_.1} parent=0 // pred_fallthru
    _
  // Predicated region
  $region14: #{_lambda_.1} parent=0 // pred_check
    _
  $region15: #{_lambda_.1} parent=0 // pred_check_branch
    %19 = sbr.rel (0) target = $region17
  $region16: #{_lambda_.1} parent=0 // pred_region
    _
  $region17: #{_lambda_.1} parent=0 // pred_fallthru
    _
  // Predicated region
  $region18: #{_lambda_.1} parent=0 // pred_check
    _
  $region19: #{_lambda_.1} parent=0 // pred_check_branch
    %21 = sbr.rel (0) target = $region21
  $region20: #{_lambda_.1} parent=0 // pred_region
    _
  $region21: #{_lambda_.1} parent=0 // pred_fallthru
    _
  %s22 = sld [smem:[#allocation3]]
  %p23 = scmp.eq.s32.totalorder %s22, 0
  // Predicated region
  $region22: #{_lambda_.1} parent=0 // pred_check
    %p24 = pneg %p23
  $region23: #{_lambda_.1} parent=0 // pred_check_branch
    %26 = sbr.rel (%p24) target = $region25
  $region24: #{_lambda_.1} parent=0 // pred_region
    %v27 = vld [vmem:[%s2] sm:$0xff]
    %v28 = vld [vmem:[%s2 + $0x8] sm:$0xff]
    %v29 = vld [vmem:[%s2 + $0x10] sm:$0xff]
    %v30 = vld [vmem:[%s2 + $0x18] sm:$0xff]
    %v31 = vld [vmem:[%s3 + $0x8] sm:$0xff]
    %v32 = vld [vmem:[%s3 + $0x18] sm:$0xff]
    %v33 = vld [vmem:[%s3 + $0x28] sm:$0xff]
    %v34 = vld [vmem:[%s3 + $0x38] sm:$0xff]
    %v35 = vld [vmem:[%s3 + $0x48] sm:$0xff]
    %v36 = vld [vmem:[%s3 + $0x58] sm:$0xff]
    %v37 = vld [vmem:[%s3 + $0x68] sm:$0xff]
    %v38 = vld [vmem:[%s3 + $0x78] sm:$0xff]
    %v39 = vld [vmem:[%s5 + $0x4] sm:$0x1]
    %v40 = vlaneseq
    %v41 = vshrl.u32 %v40, 7
    %v42 = vsub.s32 0, %v41
    %v43 = vrot.slane %v39, %v42
    %vm44 = vcmask 523264
    %v46 = vsel %vm44, %v27, 0
    %v49 = vsel %vm44, %v28, 0
    %v52 = vsel %vm44, %v29, 0
    %v55 = vsel %vm44, %v30, 0
    %57 = vmatprep.subr.mxu0 0.0
    %58 = vmatpush1.msra.mxu0 %v31
    %59 = vmatprep.subr.mxu0 0.0
    %60 = vmatpush1.msra.mxu0 %v32
    %61 = vmatprep.subr.mxu0 0.0
    %62 = vmatpush1.msra.mxu0 %v33
    %63 = vmatprep.subr.mxu0 0.0
    %64 = vmatpush1.msra.mxu0 %v34
    %65 = vmatprep.subr.mxu0 0.0
    %66 = vmatpush1.msra.mxu0 %v35
    %67 = vmatprep.subr.mxu0 0.0
    %68 = vmatpush1.msra.mxu0 %v36
    %69 = vmatprep.subr.mxu0 0.0
    %70 = vmatpush1.msra.mxu0 %v37
    %71 = vmatprep.subr.mxu0 0.0
    %72 = vmatpush1.msra.mxu0 %v38
    %73 = vmatprep.subr.mxu0 0.0
    %74 = vmatpush1.msra.mxu0 0.0
    %75 = vmatprep.subr.mxu0 0.0
    %76 = vmatpush1.msra.mxu0 0.0
    %77 = vmatprep.subr.mxu0 0.0
    %78 = vmatpush1.msra.mxu0 0.0
    %79 = vmatprep.subr.mxu0 0.0
    %80 = vmatpush1.msra.mxu0 0.0
    %81 = vmatprep.subr.mxu0 0.0
    %82 = vmatpush1.msra.mxu0 0.0
    %83 = vmatprep.subr.mxu0 0.0
    %84 = vmatpush1.msra.mxu0 0.0
    %85 = vmatprep.subr.mxu0 0.0
    %86 = vmatpush1.msra.mxu0 0.0
    %87 = vmatprep.subr.mxu0 0.0
    %88 = vmatpush1.msra.mxu0 0.0
    %89 = vmatprep.subr.mxu0 0.0
    %90 = vmatpush1.msra.mxu0 0.0
    %91 = vmatprep.subr.mxu0 0.0
    %92 = vmatpush1.msra.mxu0 0.0
    %93 = vmatprep.subr.mxu0 0.0
    %94 = vmatpush1.msra.mxu0 0.0
    %95 = vmatprep.subr.mxu0 0.0
    %96 = vmatpush1.msra.mxu0 0.0
    %97 = vmatprep.subr.mxu0 0.0
    %98 = vmatpush1.msra.mxu0 0.0
    %99 = vmatprep.subr.mxu0 0.0
    %100 = vmatpush1.msra.mxu0 0.0
    %101 = vmatprep.subr.mxu0 0.0
    %102 = vmatpush1.msra.mxu0 0.0
    %103 = vmatprep.subr.mxu0 0.0
    %104 = vmatpush1.msra.mxu0 0.0
    %105 = vmatprep.subr.mxu0 0.0
    %106 = vmatpush1.msra.mxu0 0.0
    %107 = vmatprep.subr.mxu0 0.0
    %108 = vmatpush1.msra.mxu0 0.0
    %109 = vmatprep.subr.mxu0 0.0
    %110 = vmatpush1.msra.mxu0 0.0
    %111 = vmatprep.subr.mxu0 0.0
    %112 = vmatpush1.msra.mxu0 0.0
    %113 = vmatprep.subr.mxu0 0.0
    %114 = vmatpush1.msra.mxu0 0.0
    %115 = vmatprep.subr.mxu0 0.0
    %116 = vmatpush1.msra.mxu0 0.0
    %117 = vmatprep.subr.mxu0 0.0
    %118 = vmatpush1.msra.mxu0 0.0
    %119 = vmatprep.subr.mxu0 0.0
    %120 = vmatpush1.msra.mxu0 0.0
    %121 = vmatprep.mubr.f32.mxu0 0.0
    %122 = vmatmul.mubr.f32.gmra.mrb[0].mxu0 %v46
    %v123 = vpop.f32.mrb[0].mxu0
    %v124 = vadd.f32 %v43, %v123
    %v125 = vpop.f32.mrb[0].mxu0
    %126 = vmatprep.mubr.f32.mxu0 0.0
    %127 = vmatmul.mubr.f32.gmra.mrb[0].mxu0 %v49
    %v128 = vpop.f32.mrb[0].mxu0
    %v129 = vadd.f32 %v43, %v128
    %v130 = vpop.f32.mrb[0].mxu0
    %131 = vmatprep.mubr.f32.mxu0 0.0
    %132 = vmatmul.mubr.f32.gmra.mrb[0].mxu0 %v52
    %v133 = vpop.f32.mrb[0].mxu0
    %v134 = vadd.f32 %v43, %v133
    %v135 = vpop.f32.mrb[0].mxu0
    %136 = vmatprep.mubr.f32.mxu0 0.0
    %137 = vmatmul.mubr.f32.gmra.mrb[0].mxu0 %v55
    %v138 = vpop.f32.mrb[0].mxu0
    %v139 = vadd.f32 %v43, %v138
    %v140 = vpop.f32.mrb[0].mxu0
    %141 = vdwg.mxu0
    %142 = vst [vmem:[%s6] sm:$0xff] %v124
    %143 = vst [vmem:[%s6 + $0x8] sm:$0xff] %v129
    %144 = vst [vmem:[%s6 + $0x10] sm:$0xff] %v134
    %145 = vst [vmem:[%s6 + $0x18] sm:$0xff] %v139
  $region25: #{_lambda_.1} parent=0 // pred_fallthru
    _
  %p146 = scmp.eq.s32.totalorder %s22, 32
  // Predicated region
  $region26: #{_lambda_.1} parent=0 // pred_check
    %p147 = pneg %p146
  $region27: #{_lambda_.1} parent=0 // pred_check_branch
    %149 = sbr.rel (%p147) target = $region29
  $region28: #{_lambda_.1} parent=0 // pred_region
    %v150 = vld [vmem:[%s2] sm:$0xff]
    %v151 = vld [vmem:[%s2 + $0x8] sm:$0xff]
    %v152 = vld [vmem:[%s2 + $0x10] sm:$0xff]
    %v153 = vld [vmem:[%s2 + $0x18] sm:$0xff]
    %v154 = vld [vmem:[%s3] sm:$0xff]
    %v155 = vld [vmem:[%s3 + $0x10] sm:$0xff]
    %v156 = vld [vmem:[%s3 + $0x20] sm:$0xff]
    %v157 = vld [vmem:[%s3 + $0x30] sm:$0xff]
    %v158 = vld [vmem:[%s3 + $0x40] sm:$0xff]
    %v159 = vld [vmem:[%s3 + $0x50] sm:$0xff]
    %v160 = vld [vmem:[%s3 + $0x60] sm:$0xff]
    %v161 = vld [vmem:[%s3 + $0x70] sm:$0xff]
    %vm162 = vcmask 523264
    %v164 = vsel %vm162, %v150, 0
    %v167 = vsel %vm162, %v151, 0
    %v170 = vsel %vm162, %v152, 0
    %v173 = vsel %vm162, %v153, 0
    %175 = vmatprep.subr.mxu0 0.0
    %176 = vmatpush1.msra.mxu0 %v154
    %177 = vmatprep.subr.mxu0 0.0
    %178 = vmatpush1.msra.mxu0 %v155
    %179 = vmatprep.subr.mxu0 0.0
    %180 = vmatpush1.msra.mxu0 %v156
    %181 = vmatprep.subr.mxu0 0.0
    %182 = vmatpush1.msra.mxu0 %v157
    %183 = vmatprep.subr.mxu0 0.0
    %184 = vmatpush1.msra.mxu0 %v158
    %185 = vmatprep.subr.mxu0 0.0
    %186 = vmatpush1.msra.mxu0 %v159
    %187 = vmatprep.subr.mxu0 0.0
    %188 = vmatpush1.msra.mxu0 %v160
    %189 = vmatprep.subr.mxu0 0.0
    %190 = vmatpush1.msra.mxu0 %v161
    %191 = vmatprep.subr.mxu0 0.0
    %192 = vmatpush1.msra.mxu0 0.0
    %193 = vmatprep.subr.mxu0 0.0
    %194 = vmatpush1.msra.mxu0 0.0
    %195 = vmatprep.subr.mxu0 0.0
    %196 = vmatpush1.msra.mxu0 0.0
    %197 = vmatprep.subr.mxu0 0.0
    %198 = vmatpush1.msra.mxu0 0.0
    %199 = vmatprep.subr.mxu0 0.0
    %200 = vmatpush1.msra.mxu0 0.0
    %201 = vmatprep.subr.mxu0 0.0
    %202 = vmatpush1.msra.mxu0 0.0
    %203 = vmatprep.subr.mxu0 0.0
    %204 = vmatpush1.msra.mxu0 0.0
    %205 = vmatprep.subr.mxu0 0.0
    %206 = vmatpush1.msra.mxu0 0.0
    %207 = vmatprep.subr.mxu0 0.0
    %208 = vmatpush1.msra.mxu0 0.0
    %209 = vmatprep.subr.mxu0 0.0
    %210 = vmatpush1.msra.mxu0 0.0
    %211 = vmatprep.subr.mxu0 0.0
    %212 = vmatpush1.msra.mxu0 0.0
    %213 = vmatprep.subr.mxu0 0.0
    %214 = vmatpush1.msra.mxu0 0.0
    %215 = vmatprep.subr.mxu0 0.0
    %216 = vmatpush1.msra.mxu0 0.0
    %217 = vmatprep.subr.mxu0 0.0
    %218 = vmatpush1.msra.mxu0 0.0
    %219 = vmatprep.subr.mxu0 0.0
    %220 = vmatpush1.msra.mxu0 0.0
    %221 = vmatprep.subr.mxu0 0.0
    %222 = vmatpush1.msra.mxu0 0.0
    %223 = vmatprep.subr.mxu0 0.0
    %224 = vmatpush1.msra.mxu0 0.0
    %225 = vmatprep.subr.mxu0 0.0
    %226 = vmatpush1.msra.mxu0 0.0
    %227 = vmatprep.subr.mxu0 0.0
    %228 = vmatpush1.msra.mxu0 0.0
    %229 = vmatprep.subr.mxu0 0.0
    %230 = vmatpush1.msra.mxu0 0.0
    %231 = vmatprep.subr.mxu0 0.0
    %232 = vmatpush1.msra.mxu0 0.0
    %233 = vmatprep.subr.mxu0 0.0
    %234 = vmatpush1.msra.mxu0 0.0
    %235 = vmatprep.subr.mxu0 0.0
    %236 = vmatpush1.msra.mxu0 0.0
    %237 = vmatprep.subr.mxu0 0.0
    %238 = vmatpush1.msra.mxu0 0.0
    %239 = vmatprep.mubr.f32.mxu0 0.0
    %240 = vmatmul.mubr.f32.gmra.mrb[0].mxu0 %v164
    %v241 = vpop.f32.mrb[0].mxu0
    %v242 = vadd.f32 0.0, %v241
    %v243 = vpop.f32.mrb[0].mxu0
    %244 = vmatprep.mubr.f32.mxu0 0.0
    %245 = vmatmul.mubr.f32.gmra.mrb[0].mxu0 %v167
    %v246 = vpop.f32.mrb[0].mxu0
    %v247 = vadd.f32 0.0, %v246
    %v248 = vpop.f32.mrb[0].mxu0
    %249 = vmatprep.mubr.f32.mxu0 0.0
    %250 = vmatmul.mubr.f32.gmra.mrb[0].mxu0 %v170
    %v251 = vpop.f32.mrb[0].mxu0
    %v252 = vadd.f32 0.0, %v251
    %v253 = vpop.f32.mrb[0].mxu0
    %254 = vmatprep.mubr.f32.mxu0 0.0
    %255 = vmatmul.mubr.f32.gmra.mrb[0].mxu0 %v173
    %v256 = vpop.f32.mrb[0].mxu0
    %v257 = vadd.f32 0.0, %v256
    %v258 = vpop.f32.mrb[0].mxu0
    %259 = vdwg.mxu0
    %v260 = vld [vmem:[%s5] sm:$0x1]
    %v261 = vlaneseq
    %v262 = vshrl.u32 %v261, 7
    %v263 = vsub.s32 0, %v262
    %v264 = vrot.slane %v260, %v263
    %v265 = vmul.f32 %v242, %v264
    %v266 = vmul.f32 %v247, %v264
    %v267 = vmul.f32 %v252, %v264
    %v268 = vmul.f32 %v257, %v264
    %v269 = vld [vmem:[%s5 + $0x1] sm:$0x1]
    %v270 = vlaneseq
    %v271 = vshrl.u32 %v270, 7
    %v272 = vsub.s32 0, %v271
    %v273 = vrot.slane %v269, %v272
    %v274 = vadd.f32 %v265, %v273
    %v275 = vadd.f32 %v266, %v273
    %v276 = vadd.f32 %v267, %v273
    %v277 = vadd.f32 %v268, %v273
    %v278 = vmax.f32 %v274, 0.0
    %v279 = vmax.f32 %v275, 0.0
    %v280 = vmax.f32 %v276, 0.0
    %v281 = vmax.f32 %v277, 0.0
    %v282 = vld [vmem:[%s4] sm:$0xff]
    %v283 = vld [vmem:[%s4 + $0x8] sm:$0xff]
    %v284 = vld [vmem:[%s4 + $0x10] sm:$0xff]
    %v285 = vld [vmem:[%s4 + $0x18] sm:$0xff]
    %v286 = vld [vmem:[%s4 + $0x20] sm:$0xff]
    %v287 = vld [vmem:[%s4 + $0x28] sm:$0xff]
    %v288 = vld [vmem:[%s4 + $0x30] sm:$0xff]
    %v289 = vld [vmem:[%s4 + $0x38] sm:$0xff]
    %v290 = vld [vmem:[%s4 + $0x40] sm:$0xff]
    %v291 = vld [vmem:[%s4 + $0x48] sm:$0xff]
    %v292 = vld [vmem:[%s4 + $0x50] sm:$0xff]
    %v293 = vld [vmem:[%s4 + $0x58] sm:$0xff]
    %v294 = vld [vmem:[%s4 + $0x60] sm:$0xff]
    %v295 = vld [vmem:[%s4 + $0x68] sm:$0xff]
    %v296 = vld [vmem:[%s4 + $0x70] sm:$0xff]
    %v297 = vld [vmem:[%s4 + $0x78] sm:$0xff]
    %298 = vmatprep.subr.mxu0 0.0
    %299 = vmatpush1.msra.mxu0 %v282
    %300 = vmatprep.subr.mxu0 0.0
    %301 = vmatpush1.msra.mxu0 %v283
    %302 = vmatprep.subr.mxu0 0.0
    %303 = vmatpush1.msra.mxu0 %v284
    %304 = vmatprep.subr.mxu0 0.0
    %305 = vmatpush1.msra.mxu0 %v285
    %306 = vmatprep.subr.mxu0 0.0
    %307 = vmatpush1.msra.mxu0 %v286
    %308 = vmatprep.subr.mxu0 0.0
    %309 = vmatpush1.msra.mxu0 %v287
    %310 = vmatprep.subr.mxu0 0.0
    %311 = vmatpush1.msra.mxu0 %v288
    %312 = vmatprep.subr.mxu0 0.0
    %313 = vmatpush1.msra.mxu0 %v289
    %314 = vmatprep.subr.mxu0 0.0
    %315 = vmatpush1.msra.mxu0 %v290
    %316 = vmatprep.subr.mxu0 0.0
    %317 = vmatpush1.msra.mxu0 %v291
    %318 = vmatprep.subr.mxu0 0.0
    %319 = vmatpush1.msra.mxu0 %v292
    %320 = vmatprep.subr.mxu0 0.0
    %321 = vmatpush1.msra.mxu0 %v293
    %322 = vmatprep.subr.mxu0 0.0
    %323 = vmatpush1.msra.mxu0 %v294
    %324 = vmatprep.subr.mxu0 0.0
    %325 = vmatpush1.msra.mxu0 %v295
    %326 = vmatprep.subr.mxu0 0.0
    %327 = vmatpush1.msra.mxu0 %v296
    %328 = vmatprep.subr.mxu0 0.0
    %329 = vmatpush1.msra.mxu0 %v297
    %330 = vmatprep.subr.mxu0 0.0
    %331 = vmatpush1.msra.mxu0 0.0
    %332 = vmatprep.subr.mxu0 0.0
    %333 = vmatpush1.msra.mxu0 0.0
    %334 = vmatprep.subr.mxu0 0.0
    %335 = vmatpush1.msra.mxu0 0.0
    %336 = vmatprep.subr.mxu0 0.0
    %337 = vmatpush1.msra.mxu0 0.0
    %338 = vmatprep.subr.mxu0 0.0
    %339 = vmatpush1.msra.mxu0 0.0
    %340 = vmatprep.subr.mxu0 0.0
    %341 = vmatpush1.msra.mxu0 0.0
    %342 = vmatprep.subr.mxu0 0.0
    %343 = vmatpush1.msra.mxu0 0.0
    %344 = vmatprep.subr.mxu0 0.0
    %345 = vmatpush1.msra.mxu0 0.0
    %346 = vmatprep.subr.mxu0 0.0
    %347 = vmatpush1.msra.mxu0 0.0
    %348 = vmatprep.subr.mxu0 0.0
    %349 = vmatpush1.msra.mxu0 0.0
    %350 = vmatprep.subr.mxu0 0.0
    %351 = vmatpush1.msra.mxu0 0.0
    %352 = vmatprep.subr.mxu0 0.0
    %353 = vmatpush1.msra.mxu0 0.0
    %354 = vmatprep.subr.mxu0 0.0
    %355 = vmatpush1.msra.mxu0 0.0
    %356 = vmatprep.subr.mxu0 0.0
    %357 = vmatpush1.msra.mxu0 0.0
    %358 = vmatprep.subr.mxu0 0.0
    %359 = vmatpush1.msra.mxu0 0.0
    %360 = vmatprep.subr.mxu0 0.0
    %361 = vmatpush1.msra.mxu0 0.0
    %362 = vmatprep.mubr.f32.mxu0 0.0
    %363 = vmatmul.mubr.f32.gmra.mrb[0].mxu0 %v278
    %v364 = vpop.f32.mrb[0].mxu0
    %v365 = vadd.f32 0.0, %v364
    %v366 = vpop.f32.mrb[0].mxu0
    %367 = vmatprep.mubr.f32.mxu0 0.0
    %368 = vmatmul.mubr.f32.gmra.mrb[0].mxu0 %v279
    %v369 = vpop.f32.mrb[0].mxu0
    %v370 = vadd.f32 0.0, %v369
    %v371 = vpop.f32.mrb[0].mxu0
    %372 = vmatprep.mubr.f32.mxu0 0.0
    %373 = vmatmul.mubr.f32.gmra.mrb[0].mxu0 %v280
    %v374 = vpop.f32.mrb[0].mxu0
    %v375 = vadd.f32 0.0, %v374
    %v376 = vpop.f32.mrb[0].mxu0
    %377 = vmatprep.mubr.f32.mxu0 0.0
    %378 = vmatmul.mubr.f32.gmra.mrb[0].mxu0 %v281
    %v379 = vpop.f32.mrb[0].mxu0
    %v380 = vadd.f32 0.0, %v379
    %v381 = vpop.f32.mrb[0].mxu0
    %382 = vdwg.mxu0
    %v383 = vld [vmem:[%s5 + $0x2] sm:$0x1]
    %v384 = vlaneseq
    %v385 = vshrl.u32 %v384, 7
    %v386 = vsub.s32 0, %v385
    %v387 = vrot.slane %v383, %v386
    %v388 = vmul.f32 %v365, %v387
    %v389 = vmul.f32 %v370, %v387
    %v390 = vmul.f32 %v375, %v387
    %v391 = vmul.f32 %v380, %v387
    %v392 = vld [vmem:[%s5 + $0x3] sm:$0x1]
    %v393 = vlaneseq
    %v394 = vshrl.u32 %v393, 7
    %v395 = vsub.s32 0, %v394
    %v396 = vrot.slane %v392, %v395
    %v397 = vadd.f32 %v388, %v396
    %v398 = vadd.f32 %v389, %v396
    %v399 = vadd.f32 %v390, %v396
    %v400 = vadd.f32 %v391, %v396
    %v401 = vmax.f32 %v397, 0.0
    %v402 = vmax.f32 %v398, 0.0
    %v403 = vmax.f32 %v399, 0.0
    %v404 = vmax.f32 %v400, 0.0
    %405 = vst [vmem:[%s6] sm:$0xff] %v401
    %406 = vst [vmem:[%s6 + $0x8] sm:$0xff] %v402
    %407 = vst [vmem:[%s6 + $0x10] sm:$0xff] %v403
    %408 = vst [vmem:[%s6 + $0x18] sm:$0xff] %v404
  $region29: #{_lambda_.1} parent=0 // pred_fallthru
    _
  %p409 = scmp.gt.s32.totalorder %s22, 0
  %p410 = scmp.lt.s32.totalorder %s22, 32
  %p411 = pnand %p409, %p410
  %p412 = pneg %p411
  // Predicated region
  $region30: #{_lambda_.1} parent=0 // pred_check
    _
  $region31: #{_lambda_.1} parent=0 // pred_check_branch
    %414 = sbr.rel (%p411) target = $region33
  $region32: #{_lambda_.1} parent=0 // pred_region
    %v415 = vld [vmem:[%s2] sm:$0xff]
    %v416 = vld [vmem:[%s2 + $0x8] sm:$0xff]
    %v417 = vld [vmem:[%s2 + $0x10] sm:$0xff]
    %v418 = vld [vmem:[%s2 + $0x18] sm:$0xff]
    %v419 = vld [vmem:[%s3] sm:$0xff]
    %v420 = vld [vmem:[%s3 + $0x8] sm:$0xff]
    %v421 = vld [vmem:[%s3 + $0x10] sm:$0xff]
    %v422 = vld [vmem:[%s3 + $0x18] sm:$0xff]
    %v423 = vld [vmem:[%s3 + $0x20] sm:$0xff]
    %v424 = vld [vmem:[%s3 + $0x28] sm:$0xff]
    %v425 = vld [vmem:[%s3 + $0x30] sm:$0xff]
    %v426 = vld [vmem:[%s3 + $0x38] sm:$0xff]
    %v427 = vld [vmem:[%s3 + $0x40] sm:$0xff]
    %v428 = vld [vmem:[%s3 + $0x48] sm:$0xff]
    %v429 = vld [vmem:[%s3 + $0x50] sm:$0xff]
    %v430 = vld [vmem:[%s3 + $0x58] sm:$0xff]
    %v431 = vld [vmem:[%s3 + $0x60] sm:$0xff]
    %v432 = vld [vmem:[%s3 + $0x68] sm:$0xff]
    %v433 = vld [vmem:[%s3 + $0x70] sm:$0xff]
    %v434 = vld [vmem:[%s3 + $0x78] sm:$0xff]
    %vm435 = vcmask 523264
    %v437 = vsel %vm435, %v415, 0
    %v440 = vsel %vm435, %v416, 0
    %v443 = vsel %vm435, %v417, 0
    %v446 = vsel %vm435, %v418, 0
    %448 = vmatprep.subr.mxu0 %v420
    %449 = vmatpush1.msra.mxu0 %v419
    %450 = vmatprep.subr.mxu0 %v422
    %451 = vmatpush1.msra.mxu0 %v421
    %452 = vmatprep.subr.mxu0 %v424
    %453 = vmatpush1.msra.mxu0 %v423
    %454 = vmatprep.subr.mxu0 %v426
    %455 = vmatpush1.msra.mxu0 %v425
    %456 = vmatprep.subr.mxu0 %v428
    %457 = vmatpush1.msra.mxu0 %v427
    %458 = vmatprep.subr.mxu0 %v430
    %459 = vmatpush1.msra.mxu0 %v429
    %460 = vmatprep.subr.mxu0 %v432
    %461 = vmatpush1.msra.mxu0 %v431
    %462 = vmatprep.subr.mxu0 %v434
    %463 = vmatpush1.msra.mxu0 %v433
    %464 = vmatprep.subr.mxu0 0.0
    %465 = vmatpush1.msra.mxu0 0.0
    %466 = vmatprep.subr.mxu0 0.0
    %467 = vmatpush1.msra.mxu0 0.0
    %468 = vmatprep.subr.mxu0 0.0
    %469 = vmatpush1.msra.mxu0 0.0
    %470 = vmatprep.subr.mxu0 0.0
    %471 = vmatpush1.msra.mxu0 0.0
    %472 = vmatprep.subr.mxu0 0.0
    %473 = vmatpush1.msra.mxu0 0.0
    %474 = vmatprep.subr.mxu0 0.0
    %475 = vmatpush1.msra.mxu0 0.0
    %476 = vmatprep.subr.mxu0 0.0
    %477 = vmatpush1.msra.mxu0 0.0
    %478 = vmatprep.subr.mxu0 0.0
    %479 = vmatpush1.msra.mxu0 0.0
    %480 = vmatprep.subr.mxu0 0.0
    %481 = vmatpush1.msra.mxu0 0.0
    %482 = vmatprep.subr.mxu0 0.0
    %483 = vmatpush1.msra.mxu0 0.0
    %484 = vmatprep.subr.mxu0 0.0
    %485 = vmatpush1.msra.mxu0 0.0
    %486 = vmatprep.subr.mxu0 0.0
    %487 = vmatpush1.msra.mxu0 0.0
    %488 = vmatprep.subr.mxu0 0.0
    %489 = vmatpush1.msra.mxu0 0.0
    %490 = vmatprep.subr.mxu0 0.0
    %491 = vmatpush1.msra.mxu0 0.0
    %492 = vmatprep.subr.mxu0 0.0
    %493 = vmatpush1.msra.mxu0 0.0
    %494 = vmatprep.subr.mxu0 0.0
    %495 = vmatpush1.msra.mxu0 0.0
    %496 = vmatprep.subr.mxu0 0.0
    %497 = vmatpush1.msra.mxu0 0.0
    %498 = vmatprep.subr.mxu0 0.0
    %499 = vmatpush1.msra.mxu0 0.0
    %500 = vmatprep.subr.mxu0 0.0
    %501 = vmatpush1.msra.mxu0 0.0
    %502 = vmatprep.subr.mxu0 0.0
    %503 = vmatpush1.msra.mxu0 0.0
    %504 = vmatprep.subr.mxu0 0.0
    %505 = vmatpush1.msra.mxu0 0.0
    %506 = vmatprep.subr.mxu0 0.0
    %507 = vmatpush1.msra.mxu0 0.0
    %508 = vmatprep.subr.mxu0 0.0
    %509 = vmatpush1.msra.mxu0 0.0
    %510 = vmatprep.subr.mxu0 0.0
    %511 = vmatpush1.msra.mxu0 0.0
    %512 = vmatprep.mubr.f32.mxu0 0.0
    %513 = vmatmul.mubr.f32.gmra.mrb[0].mxu0 %v437
    %v514 = vpop.f32.mrb[0].mxu0
    %v515 = vadd.f32 0.0, %v514
    %v516 = vpop.f32.mrb[0].mxu0
    %v517 = vadd.f32 0.0, %v516
    %518 = vmatprep.mubr.f32.mxu0 0.0
    %519 = vmatmul.mubr.f32.gmra.mrb[0].mxu0 %v440
    %v520 = vpop.f32.mrb[0].mxu0
    %v521 = vadd.f32 0.0, %v520
    %v522 = vpop.f32.mrb[0].mxu0
    %v523 = vadd.f32 0.0, %v522
    %524 = vmatprep.mubr.f32.mxu0 0.0
    %525 = vmatmul.mubr.f32.gmra.mrb[0].mxu0 %v443
    %v526 = vpop.f32.mrb[0].mxu0
    %v527 = vadd.f32 0.0, %v526
    %v528 = vpop.f32.mrb[0].mxu0
    %v529 = vadd.f32 0.0, %v528
    %530 = vmatprep.mubr.f32.mxu0 0.0
    %531 = vmatmul.mubr.f32.gmra.mrb[0].mxu0 %v446
    %v532 = vpop.f32.mrb[0].mxu0
    %v533 = vadd.f32 0.0, %v532
    %v534 = vpop.f32.mrb[0].mxu0
    %v535 = vadd.f32 0.0, %v534
    %536 = vdwg.mxu0
    %v537 = vld [vmem:[%s5 + $0x4] sm:$0x1]
    %v538 = vlaneseq
    %v539 = vshrl.u32 %v538, 7
    %v540 = vsub.s32 0, %v539
    %v541 = vrot.slane %v537, %v540
    %v542 = vadd.f32 %v517, %v541
    %v543 = vadd.f32 %v523, %v541
    %v544 = vadd.f32 %v529, %v541
    %v545 = vadd.f32 %v535, %v541
    %v546 = vld [vmem:[%s5] sm:$0x1]
    %v547 = vlaneseq
    %v548 = vshrl.u32 %v547, 7
    %v549 = vsub.s32 0, %v548
    %v550 = vrot.slane %v546, %v549
    %v551 = vmul.f32 %v515, %v550
    %v552 = vmul.f32 %v521, %v550
    %v553 = vmul.f32 %v527, %v550
    %v554 = vmul.f32 %v533, %v550
    %v555 = vld [vmem:[%s5 + $0x1] sm:$0x1]
    %v556 = vlaneseq
    %v557 = vshrl.u32 %v556, 7
    %v558 = vsub.s32 0, %v557
    %v559 = vrot.slane %v555, %v558
    %v560 = vadd.f32 %v551, %v559
    %v561 = vadd.f32 %v552, %v559
    %v562 = vadd.f32 %v553, %v559
    %v563 = vadd.f32 %v554, %v559
    %v564 = vmax.f32 %v560, 0.0
    %v565 = vmax.f32 %v561, 0.0
    %v566 = vmax.f32 %v562, 0.0
    %v567 = vmax.f32 %v563, 0.0
    %v568 = vld [vmem:[%s4] sm:$0xff]
    %v569 = vld [vmem:[%s4 + $0x8] sm:$0xff]
    %v570 = vld [vmem:[%s4 + $0x10] sm:$0xff]
    %v571 = vld [vmem:[%s4 + $0x18] sm:$0xff]
    %v572 = vld [vmem:[%s4 + $0x20] sm:$0xff]
    %v573 = vld [vmem:[%s4 + $0x28] sm:$0xff]
    %v574 = vld [vmem:[%s4 + $0x30] sm:$0xff]
    %v575 = vld [vmem:[%s4 + $0x38] sm:$0xff]
    %v576 = vld [vmem:[%s4 + $0x40] sm:$0xff]
    %v577 = vld [vmem:[%s4 + $0x48] sm:$0xff]
    %v578 = vld [vmem:[%s4 + $0x50] sm:$0xff]
    %v579 = vld [vmem:[%s4 + $0x58] sm:$0xff]
    %v580 = vld [vmem:[%s4 + $0x60] sm:$0xff]
    %v581 = vld [vmem:[%s4 + $0x68] sm:$0xff]
    %v582 = vld [vmem:[%s4 + $0x70] sm:$0xff]
    %v583 = vld [vmem:[%s4 + $0x78] sm:$0xff]
    %584 = vmatprep.subr.mxu0 0.0
    %585 = vmatpush1.msra.mxu0 %v568
    %586 = vmatprep.subr.mxu0 0.0
    %587 = vmatpush1.msra.mxu0 %v569
    %588 = vmatprep.subr.mxu0 0.0
    %589 = vmatpush1.msra.mxu0 %v570
    %590 = vmatprep.subr.mxu0 0.0
    %591 = vmatpush1.msra.mxu0 %v571
    %592 = vmatprep.subr.mxu0 0.0
    %593 = vmatpush1.msra.mxu0 %v572
    %594 = vmatprep.subr.mxu0 0.0
    %595 = vmatpush1.msra.mxu0 %v573
    %596 = vmatprep.subr.mxu0 0.0
    %597 = vmatpush1.msra.mxu0 %v574
    %598 = vmatprep.subr.mxu0 0.0
    %599 = vmatpush1.msra.mxu0 %v575
    %600 = vmatprep.subr.mxu0 0.0
    %601 = vmatpush1.msra.mxu0 %v576
    %602 = vmatprep.subr.mxu0 0.0
    %603 = vmatpush1.msra.mxu0 %v577
    %604 = vmatprep.subr.mxu0 0.0
    %605 = vmatpush1.msra.mxu0 %v578
    %606 = vmatprep.subr.mxu0 0.0
    %607 = vmatpush1.msra.mxu0 %v579
    %608 = vmatprep.subr.mxu0 0.0
    %609 = vmatpush1.msra.mxu0 %v580
    %610 = vmatprep.subr.mxu0 0.0
    %611 = vmatpush1.msra.mxu0 %v581
    %612 = vmatprep.subr.mxu0 0.0
    %613 = vmatpush1.msra.mxu0 %v582
    %614 = vmatprep.subr.mxu0 0.0
    %615 = vmatpush1.msra.mxu0 %v583
    %616 = vmatprep.subr.mxu0 0.0
    %617 = vmatpush1.msra.mxu0 0.0
    %618 = vmatprep.subr.mxu0 0.0
    %619 = vmatpush1.msra.mxu0 0.0
    %620 = vmatprep.subr.mxu0 0.0
    %621 = vmatpush1.msra.mxu0 0.0
    %622 = vmatprep.subr.mxu0 0.0
    %623 = vmatpush1.msra.mxu0 0.0
    %624 = vmatprep.subr.mxu0 0.0
    %625 = vmatpush1.msra.mxu0 0.0
    %626 = vmatprep.subr.mxu0 0.0
    %627 = vmatpush1.msra.mxu0 0.0
    %628 = vmatprep.subr.mxu0 0.0
    %629 = vmatpush1.msra.mxu0 0.0
    %630 = vmatprep.subr.mxu0 0.0
    %631 = vmatpush1.msra.mxu0 0.0
    %632 = vmatprep.subr.mxu0 0.0
    %633 = vmatpush1.msra.mxu0 0.0
    %634 = vmatprep.subr.mxu0 0.0
    %635 = vmatpush1.msra.mxu0 0.0
    %636 = vmatprep.subr.mxu0 0.0
    %637 = vmatpush1.msra.mxu0 0.0
    %638 = vmatprep.subr.mxu0 0.0
    %639 = vmatpush1.msra.mxu0 0.0
    %640 = vmatprep.subr.mxu0 0.0
    %641 = vmatpush1.msra.mxu0 0.0
    %642 = vmatprep.subr.mxu0 0.0
    %643 = vmatpush1.msra.mxu0 0.0
    %644 = vmatprep.subr.mxu0 0.0
    %645 = vmatpush1.msra.mxu0 0.0
    %646 = vmatprep.subr.mxu0 0.0
    %647 = vmatpush1.msra.mxu0 0.0
    %648 = vmatprep.mubr.f32.mxu0 0.0
    %649 = vmatmul.mubr.f32.gmra.mrb[0].mxu0 %v564
    %v650 = vpop.f32.mrb[0].mxu0
    %v651 = vadd.f32 0.0, %v650
    %v652 = vpop.f32.mrb[0].mxu0
    %653 = vmatprep.mubr.f32.mxu0 0.0
    %654 = vmatmul.mubr.f32.gmra.mrb[0].mxu0 %v565
    %v655 = vpop.f32.mrb[0].mxu0
    %v656 = vadd.f32 0.0, %v655
    %v657 = vpop.f32.mrb[0].mxu0
    %658 = vmatprep.mubr.f32.mxu0 0.0
    %659 = vmatmul.mubr.f32.gmra.mrb[0].mxu0 %v566
    %v660 = vpop.f32.mrb[0].mxu0
    %v661 = vadd.f32 0.0, %v660
    %v662 = vpop.f32.mrb[0].mxu0
    %663 = vmatprep.mubr.f32.mxu0 0.0
    %664 = vmatmul.mubr.f32.gmra.mrb[0].mxu0 %v567
    %v665 = vpop.f32.mrb[0].mxu0
    %v666 = vadd.f32 0.0, %v665
    %v667 = vpop.f32.mrb[0].mxu0
    %668 = vdwg.mxu0
    %v669 = vld [vmem:[%s5 + $0x2] sm:$0x1]
    %v670 = vlaneseq
    %v671 = vshrl.u32 %v670, 7
    %v672 = vsub.s32 0, %v671
    %v673 = vrot.slane %v669, %v672
    %v674 = vmul.f32 %v651, %v673
    %v675 = vmul.f32 %v656, %v673
    %v676 = vmul.f32 %v661, %v673
    %v677 = vmul.f32 %v666, %v673
    %v678 = vld [vmem:[%s5 + $0x3] sm:$0x1]
    %v679 = vlaneseq
    %v680 = vshrl.u32 %v679, 7
    %v681 = vsub.s32 0, %v680
    %v682 = vrot.slane %v678, %v681
    %v683 = vadd.f32 %v674, %v682
    %v684 = vadd.f32 %v675, %v682
    %v685 = vadd.f32 %v676, %v682
    %v686 = vadd.f32 %v677, %v682
    %v687 = vmax.f32 %v683, 0.0
    %v688 = vmax.f32 %v684, 0.0
    %v689 = vmax.f32 %v685, 0.0
    %v690 = vmax.f32 %v686, 0.0
    %v691 = vld [vmem:[%s1] sm:$0xff]
    %v692 = vld [vmem:[%s1 + $0x8] sm:$0xff]
    %v693 = vld [vmem:[%s1 + $0x10] sm:$0xff]
    %v694 = vld [vmem:[%s1 + $0x18] sm:$0xff]
    %vm695 = vcmp.gt.f32.partialorder %v691, 0.0
    %vm696 = vcmp.gt.f32.partialorder %v692, 0.0
    %vm697 = vcmp.gt.f32.partialorder %v693, 0.0
    %vm698 = vcmp.gt.f32.partialorder %v694, 0.0
    %v699 = vsel %vm695, 1, 0
    %v700 = vsel %vm696, 1, 0
    %v701 = vsel %vm697, 1, 0
    %v702 = vsel %vm698, 1, 0
    %703 = vset.pattern.permute.xlu0 0
    %704 = vperm.xlu0 %703, %v699
    %v705 = vpop.permute.xlu0 %704
    %706 = vset.pattern.permute.xlu0 0
    %707 = vperm.xlu0 %706, %v700
    %v708 = vpop.permute.xlu0 %707
    %709 = vset.pattern.permute.xlu0 0
    %710 = vperm.xlu0 %709, %v701
    %v711 = vpop.permute.xlu0 %710
    %712 = vset.pattern.permute.xlu0 0
    %713 = vperm.xlu0 %712, %v702
    %v714 = vpop.permute.xlu0 %713
    %vm715 = vcmp.eq.s32.totalorder %v705, 1
    %vm716 = vcmp.eq.s32.totalorder %v708, 1
    %vm717 = vcmp.eq.s32.totalorder %v711, 1
    %vm718 = vcmp.eq.s32.totalorder %v714, 1
    %v719 = vsel %vm715, %v687, %v542
    %v720 = vsel %vm716, %v688, %v543
    %v721 = vsel %vm717, %v689, %v544
    %v722 = vsel %vm718, %v690, %v545
    %723 = vst [vmem:[%s6] sm:$0xff] %v719
    %724 = vst [vmem:[%s6 + $0x8] sm:$0xff] %v720
    %725 = vst [vmem:[%s6 + $0x10] sm:$0xff] %v721
    %726 = vst [vmem:[%s6 + $0x18] sm:$0xff] %v722
  $region33: #{_lambda_.1} parent=0 // pred_fallthru
    _
  // Predicated region
  $region34: #{_lambda_.1} parent=0 // pred_check
    _
  $region35: #{_lambda_.1} parent=0 // pred_check_branch
    %728 = sbr.rel (0) target = $region37
  $region36: #{_lambda_.1} parent=0 // pred_region
    _
  $region37: #{_lambda_.1} parent=0 // pred_fallthru
    _
  // Predicated region
  $region38: #{_lambda_.1} parent=0 // pred_check
    _
  $region39: #{_lambda_.1} parent=0 // pred_check_branch
    %730 = sbr.rel (0) target = $region41
  $region40: #{_lambda_.1} parent=0 // pred_region
    _
  $region41: #{_lambda_.1} parent=0 // pred_fallthru
    _

</llo_original>
